<compile_context>
chip_gen: v5e
topology: v5e:2x2
jax: 0.10.0
libtpu: 0.0.40
codegen_flags: <defaults>
</compile_context>

<pallas_src>
import functools

import jax
import jax.numpy as jnp
from jax.experimental import pallas as pl
from jax.experimental.pallas import tpu as pltpu


def _choose_col_tile(W, itemsize):
    """In-kernel contraction tile of the input width. Bounded K keeps the gather
    matmul comfortably under the HBM roofline on every generation."""
    max_k = 128 if itemsize >= 4 else 256
    if W <= max_k:
        return W
    for kt in range(max_k, 127, -128):          # multiple-of-128 divisor of W
        if W % kt == 0:
            return kt
    # TODO(synk): widths with no multiple-of-128 divisor fall back to one full-width
    # contraction (K = W) -- VMEM stays small but v5e f32 can become MXU-bound there.
    return W


def _choose_row_fold(M, W, s):
    """Fold k consecutive input rows into the lane axis only when one row's output
    chunk (s*s*W lanes) would be lane-sparse, keeping HBM writeback dense."""
    k = 1
    while (k * s * s * W < 256) and (M % (2 * k) == 0) and (k < 16):
        k *= 2
    return k


def _choose_row_block(Mf, out_row_bytes, row_mult):
    """Folded rows per grid step: ~4 MiB output blocks (2-8 MiB hits ~85% of the HBM
    roofline), >= ~8 pipelined steps on large problems, sublane-aligned row counts."""
    if Mf <= row_mult:
        return Mf
    mb = max(1, (4 << 20) // max(out_row_bytes, 1))
    if Mf >= 8 * row_mult:                      # keep the pipeline busy / >=2 per core
        mb = min(mb, Mf // 8)
    mb = max(row_mult, (mb // row_mult) * row_mult)
    return Mf if mb >= Mf else mb


@functools.partial(jax.jit, static_argnames=("scale_factor",))
def interpolate_nearest(x, scale_factor=2):
    """Nearest-neighbor upsampling of an NCHW tensor by an integer scale factor."""
    assert x.ndim == 4, "expected NCHW input"
    B, C, H, W = x.shape
    s = int(scale_factor)
    OH, OW = H * s, W * s
    M = B * C * H
    itemsize = jnp.dtype(x.dtype).itemsize

    # Compute dtype: bf16 stays bf16 (exact for a 0/1 gather); everything else via f32.
    cdtype = jnp.bfloat16 if x.dtype == jnp.bfloat16 else jnp.float32
    # TODO(synk): integer inputs route through an f32 matmul (exact only up to 2**24),
    # and an inf/NaN input element poisons its own s*OW output chunk (0*inf terms);
    # a pure gather/replicate formulation would match PyTorch bit-for-bit there.

    KT = _choose_col_tile(W, itemsize)          # contraction tile (K of each matmul)
    nT = W // KT                                # width tiles per input row
    k = _choose_row_fold(M, W, s) if nT == 1 else 1
    Mf = M // k
    chunk = k * s * s * W                       # contiguous output per folded row

    # Column gather implementing PyTorch's nearest rule for integer scale (src = dst//s);
    # one small matrix shared by every width tile and every folded row.
    lanes = jnp.arange(KT * s)
    G = (lanes[None, :] // s == jnp.arange(KT)[:, None]).astype(cdtype)   # (KT, s*KT)

    x2 = x.reshape(Mf, k * W)                   # contiguous row-major -> free reshape

    row_mult = max(8, 32 // max(itemsize, 1))   # 8 f32 / 16 bf16 / 32 int8 sublanes
    mb = _choose_row_block(Mf, chunk * itemsize, row_mult)
    grid = (pl.cdiv(Mf, mb),)

    def kernel(x_ref, g_ref, o_ref):
        # x_ref: (mb, k*W)   g_ref: (KT, s*KT)   o_ref: (mb, k*s*s*W)
        g = g_ref[...]
        for c in range(k):                      # folded input rows (static, small)
            for t in range(nT):                 # width tiles of one input row
                xs = x_ref[:, (c * nT + t) * KT:(c * nT + t + 1) * KT]
                if xs.dtype != g.dtype:         # trace-time; only non-float inputs
                    xs = xs.astype(g.dtype)
                y = jnp.dot(xs, g, preferred_element_type=jnp.float32)
                y = y.astype(o_ref.dtype)
                base = c * s * OW + t * KT * s
                for r in range(s):              # row replicas: s stores, no extra MXU
                    off = base + r * OW
                    o_ref[:, off:off + KT * s] = y

    # Explicit VMEM budget: in/out double-buffered + resident gather matrix; cap at
    # 48 MiB so it compiles on v7x (64 MiB/TC) while lifting v5e's 16 MiB default.
    in_block = mb * k * W * itemsize
    out_block = mb * chunk * itemsize
    g_bytes = G.size * jnp.dtype(cdtype).itemsize
    vmem_est = 2 * (in_block + out_block + g_bytes)
    vmem_limit = int(min(max(vmem_est + (8 << 20), 32 << 20), 48 << 20))

    cost = pl.CostEstimate(
        flops=2 * M * W * s * KT,
        transcendentals=0,
        bytes_accessed=x.size * itemsize * (1 + s * s) + g_bytes,
    )

    out2 = pl.pallas_call(
        kernel,
        out_shape=jax.ShapeDtypeStruct((Mf, chunk), x.dtype),
        grid=grid,
        in_specs=[
            pl.BlockSpec((mb, k * W), lambda i: (i, 0)),
            pl.BlockSpec((KT, KT * s), lambda i: (0, 0)),   # gather matrix stays resident
        ],
        out_specs=pl.BlockSpec((mb, chunk), lambda i: (i, 0)),
        compiler_params=pltpu.CompilerParams(
            dimension_semantics=("parallel",),
            vmem_limit_bytes=vmem_limit,
        ),
        cost_estimate=cost,
    )(x2, G)

    # (Mf, k*s*s*W) is exactly the row-major layout of (B, C, OH, OW): free reshape.
    return out2.reshape(B, C, OH, OW)


class Interpolate:
    """JAX/Pallas counterpart of the PyTorch Interpolate module."""

    def __init__(self, size=None, scale_factor=None, mode='nearest', align_corners=None):
        # TODO(synk): only mode='nearest' with an integer scale_factor lowers to the
        # Pallas kernel; explicit `size` and bilinear/bicubic/trilinear modes are not
        # implemented here.
        assert mode == 'nearest', "only mode='nearest' is implemented"
        assert scale_factor is not None and int(scale_factor) == scale_factor
        self.scale_factor = int(scale_factor)

    def __call__(self, x):
        return interpolate_nearest(x, scale_factor=self.scale_factor)


if __name__ == "__main__":
    key = jax.random.PRNGKey(0)
    B, C, H, W = 2, 4, 16, 16
    x = jax.random.normal(key, (B, C, H, W), dtype=jnp.float32)

    module = Interpolate(scale_factor=2, mode='nearest')
    y = jax.block_until_ready(module(x))

    # Pure-JAX reference for nearest upsampling (scale 2): repeat each pixel 2x2.
    ref = jnp.repeat(jnp.repeat(x, 2, axis=2), 2, axis=3)
    assert y.shape == (B, C, 2 * H, 2 * W), y.shape
    assert y.dtype == x.dtype
    assert jnp.allclose(y, ref, atol=1e-6), "f32 mismatch vs reference"

    # bf16 path (native MXU, no upcast) is also exact for a 0/1 gather.
    xb = x.astype(jnp.bfloat16)
    yb = jax.block_until_ready(module(xb))
    refb = jnp.repeat(jnp.repeat(xb, 2, axis=2), 2, axis=3)
    assert yb.dtype == jnp.bfloat16
    assert jnp.allclose(yb.astype(jnp.float32), refb.astype(jnp.float32)), "bf16 mismatch"

    print("KERNEL_OK")
</pallas_src>

<mosaic_0001>
module attributes {stable_mosaic.version = 11 : i64} {
  func.func @kernel(%arg0: i32, %arg1: memref<32x64xf32, #tpu.memory_space<vmem>>, %arg2: memref<16x32xf32, #tpu.memory_space<vmem>>, %arg3: memref<32x256xf32, #tpu.memory_space<vmem>>) attributes {dimension_semantics = [#tpu.dimension_semantics<parallel>], iteration_bounds = array<i64: 1>, scalar_prefetch = 0 : i64, scratch_operands = 0 : i64, tpu.core_type = #tpu.core_type<tc>, window_params = [{transform_indices = @transform_0, window_bounds = array<i64: 32, 64>}, {pipeline_mode = #tpu.pipeline_mode<synchronous>, transform_indices = @transform_1, window_bounds = array<i64: 16, 32>}, {transform_indices = @transform_2, window_bounds = array<i64: 32, 256>}]} {
    %c0 = arith.constant 0 : index
    %c0_0 = arith.constant 0 : index
    %0 = vector.load %arg2[%c0, %c0_0] : memref<16x32xf32, #tpu.memory_space<vmem>>, vector<16x32xf32>
    %c0_1 = arith.constant 0 : index
    %c0_2 = arith.constant 0 : index
    %1 = vector.load %arg1[%c0_1, %c0_2] : memref<32x64xf32, #tpu.memory_space<vmem>>, vector<32x16xf32>
    %cst = arith.constant dense<0.000000e+00> : vector<32x32xf32>
    %2 = tpu.matmul %1, %0, %cst {dimension_numbers = #tpu.dot_dimension_numbers<[1], [0], [0], [1], [0, 0, 1, 1], [], []>} : vector<32x16xf32>, vector<16x32xf32>, vector<32x32xf32> -> vector<32x32xf32>
    %c0_3 = arith.constant 0 : index
    %c0_4 = arith.constant 0 : index
    %3 = vector.load %arg3[%c0_3, %c0_4] : memref<32x256xf32, #tpu.memory_space<vmem>>, vector<32x32xf32>
    tpu.vector_store %arg3[%c0_3, %c0_4], %2 {strides = array<i32>} : memref<32x256xf32, #tpu.memory_space<vmem>>, vector<32x32xf32>,
    %c0_5 = arith.constant 0 : index
    %c32 = arith.constant 32 : index
    %4 = vector.load %arg3[%c0_5, %c32] : memref<32x256xf32, #tpu.memory_space<vmem>>, vector<32x32xf32>
    tpu.vector_store %arg3[%c0_5, %c32], %2 {strides = array<i32>} : memref<32x256xf32, #tpu.memory_space<vmem>>, vector<32x32xf32>,
    %c0_6 = arith.constant 0 : index
    %c16 = arith.constant 16 : index
    %5 = vector.load %arg1[%c0_6, %c16] : memref<32x64xf32, #tpu.memory_space<vmem>>, vector<32x16xf32>
    %cst_7 = arith.constant dense<0.000000e+00> : vector<32x32xf32>
    %6 = tpu.matmul %5, %0, %cst_7 {dimension_numbers = #tpu.dot_dimension_numbers<[1], [0], [0], [1], [0, 0, 1, 1], [], []>} : vector<32x16xf32>, vector<16x32xf32>, vector<32x32xf32> -> vector<32x32xf32>
    %c0_8 = arith.constant 0 : index
    %c64 = arith.constant 64 : index
    %7 = vector.load %arg3[%c0_8, %c64] : memref<32x256xf32, #tpu.memory_space<vmem>>, vector<32x32xf32>
    tpu.vector_store %arg3[%c0_8, %c64], %6 {strides = array<i32>} : memref<32x256xf32, #tpu.memory_space<vmem>>, vector<32x32xf32>,
    %c0_9 = arith.constant 0 : index
    %c96 = arith.constant 96 : index
    %8 = vector.load %arg3[%c0_9, %c96] : memref<32x256xf32, #tpu.memory_space<vmem>>, vector<32x32xf32>
    tpu.vector_store %arg3[%c0_9, %c96], %6 {strides = array<i32>} : memref<32x256xf32, #tpu.memory_space<vmem>>, vector<32x32xf32>,
    %c0_10 = arith.constant 0 : index
    %c32_11 = arith.constant 32 : index
    %9 = vector.load %arg1[%c0_10, %c32_11] : memref<32x64xf32, #tpu.memory_space<vmem>>, vector<32x16xf32>
    %cst_12 = arith.constant dense<0.000000e+00> : vector<32x32xf32>
    %10 = tpu.matmul %9, %0, %cst_12 {dimension_numbers = #tpu.dot_dimension_numbers<[1], [0], [0], [1], [0, 0, 1, 1], [], []>} : vector<32x16xf32>, vector<16x32xf32>, vector<32x32xf32> -> vector<32x32xf32>
    %c0_13 = arith.constant 0 : index
    %c128 = arith.constant 128 : index
    %11 = vector.load %arg3[%c0_13, %c128] : memref<32x256xf32, #tpu.memory_space<vmem>>, vector<32x32xf32>
    tpu.vector_store %arg3[%c0_13, %c128], %10 {strides = array<i32>} : memref<32x256xf32, #tpu.memory_space<vmem>>, vector<32x32xf32>,
    %c0_14 = arith.constant 0 : index
    %c160 = arith.constant 160 : index
    %12 = vector.load %arg3[%c0_14, %c160] : memref<32x256xf32, #tpu.memory_space<vmem>>, vector<32x32xf32>
    tpu.vector_store %arg3[%c0_14, %c160], %10 {strides = array<i32>} : memref<32x256xf32, #tpu.memory_space<vmem>>, vector<32x32xf32>,
    %c0_15 = arith.constant 0 : index
    %c48 = arith.constant 48 : index
    %13 = vector.load %arg1[%c0_15, %c48] : memref<32x64xf32, #tpu.memory_space<vmem>>, vector<32x16xf32>
    %cst_16 = arith.constant dense<0.000000e+00> : vector<32x32xf32>
    %14 = tpu.matmul %13, %0, %cst_16 {dimension_numbers = #tpu.dot_dimension_numbers<[1], [0], [0], [1], [0, 0, 1, 1], [], []>} : vector<32x16xf32>, vector<16x32xf32>, vector<32x32xf32> -> vector<32x32xf32>
    %c0_17 = arith.constant 0 : index
    %c192 = arith.constant 192 : index
    %15 = vector.load %arg3[%c0_17, %c192] : memref<32x256xf32, #tpu.memory_space<vmem>>, vector<32x32xf32>
    tpu.vector_store %arg3[%c0_17, %c192], %14 {strides = array<i32>} : memref<32x256xf32, #tpu.memory_space<vmem>>, vector<32x32xf32>,
    %c0_18 = arith.constant 0 : index
    %c224 = arith.constant 224 : index
    %16 = vector.load %arg3[%c0_18, %c224] : memref<32x256xf32, #tpu.memory_space<vmem>>, vector<32x32xf32>
    tpu.vector_store %arg3[%c0_18, %c224], %14 {strides = array<i32>} : memref<32x256xf32, #tpu.memory_space<vmem>>, vector<32x32xf32>,
    return
  }
  func.func @transform_0(%arg0: i32) -> (i32, i32) {
    %c0_i32 = arith.constant 0 : i32
    %c0_i32_0 = arith.constant 0 : i32
    return %arg0, %c0_i32 : i32, i32
  }
  func.func @transform_1(%arg0: i32) -> (i32, i32) {
    %c0_i32 = arith.constant 0 : i32
    %c0_i32_0 = arith.constant 0 : i32
    %c0_i32_1 = arith.constant 0 : i32
    return %c0_i32, %c0_i32_0 : i32, i32
  }
  func.func @transform_2(%arg0: i32) -> (i32, i32) {
    %c0_i32 = arith.constant 0 : i32
    %c0_i32_0 = arith.constant 0 : i32
    return %arg0, %c0_i32 : i32, i32
  }
}

</mosaic_0001>

<llo_original>
// kernel: interpolate_nearest.1
$region0: #{interpolate_nearest.1}
  #allocation0 [shape = 'u32[]', space=smem, size = 0x4, offset = 0x4, fixed_abs, tag = 'smem constant byte address 0x4 - core index']
  #allocation1 [shape = 'u32[72,128]{1,0:T(1,128)}', space=vmem, size = 0x9000, scoped, tag = 'internal scratch']
  %s0 = inlined_call_operand.vmem [shape: f32[32,64], index: 0, kind: input, shape index: {}]
  %s1 = inlined_call_operand.vmem [shape: f32[16,32], index: 1, kind: input, shape index: {}]
  %s2 = inlined_call_operand.vmem [shape: f32[32,256], index: 2, kind: output, shape index: {}]
  %s3 = sld [smem:[#allocation0]]
  $region18: #{interpolate_nearest.1} parent=0
    _
  %s5 = ssub.s32 1, %s3
  %s6 = scalar_select 0, %s5, %s3
  // Predicated region
  $region2: #{interpolate_nearest.1} parent=0 // pred_check
    _
  $region3: #{interpolate_nearest.1} parent=0 // pred_check_branch
    %8 = sbr.rel (0) target = $region5
  $region4: #{interpolate_nearest.1} parent=0 // pred_region
    _
  $region5: #{interpolate_nearest.1} parent=0 // pred_fallthru
    _
  // Predicated region
  $region6: #{interpolate_nearest.1} parent=0 // pred_check
    _
  $region7: #{interpolate_nearest.1} parent=0 // pred_check_branch
    %10 = sbr.rel (0) target = $region9
  $region8: #{interpolate_nearest.1} parent=0 // pred_region
    _
  $region9: #{interpolate_nearest.1} parent=0 // pred_fallthru
    _
  %v11 = vld [vmem:[%s1] sm:$0xff]
  %v12 = vld [vmem:[%s1 + $0x8] sm:$0xff]
  %v13 = vld [vmem:[%s0] sm:$0xff]
  %v14 = vld [vmem:[%s0 + $0x8] sm:$0xff]
  %v15 = vld [vmem:[%s0 + $0x10] sm:$0xff]
  %v16 = vld [vmem:[%s0 + $0x18] sm:$0xff]
  %vm17 = vcmask 130048
  %v19 = vsel %vm17, %v13, 0
  %v22 = vsel %vm17, %v14, 0
  %v25 = vsel %vm17, %v15, 0
  %v28 = vsel %vm17, %v16, 0
  %30 = vmatpush.msra.mxu0 0.0
  %31 = vmatpush.msra.mxu0 0.0
  %32 = vmatpush.msra.mxu0 0.0
  %33 = vmatpush.msra.mxu0 0.0
  %34 = vmatpush.msra.mxu0 0.0
  %35 = vmatpush.msra.mxu0 0.0
  %36 = vmatpush.msra.mxu0 0.0
  %37 = vmatpush.msra.mxu0 0.0
  %38 = vmatpush.msra.mxu0 0.0
  %39 = vmatpush.msra.mxu0 0.0
  %40 = vmatpush.msra.mxu0 0.0
  %41 = vmatpush.msra.mxu0 0.0
  %42 = vmatpush.msra.mxu0 0.0
  %43 = vmatpush.msra.mxu0 0.0
  %44 = vmatpush.msra.mxu0 %v12
  %45 = vmatpush.msra.mxu0 %v11
  %46 = vmatmul.f32.gmra.mxu0 %v19
  %v47 = vpop.f32.mrf.mxu0
  %v48 = vadd.f32 0.0, %v47
  %49 = vmatmul.f32.gmra.mxu0 %v22
  %v50 = vpop.f32.mrf.mxu0
  %v51 = vadd.f32 0.0, %v50
  %52 = vmatmul.f32.gmra.mxu0 %v25
  %v53 = vpop.f32.mrf.mxu0
  %v54 = vadd.f32 0.0, %v53
  %55 = vmatmul.f32.gmra.mxu0 %v28
  %v56 = vpop.f32.mrf.mxu0
  %v57 = vadd.f32 0.0, %v56
  %58 = vdwg.mxu0
  %vm59 = vcmask 261120
  %60 = vst.msk [vmem:[%s2] sm:$0xff] %vm59, %v48
  %61 = vst.msk [vmem:[%s2 + $0x10] sm:$0xff] %vm59, %v51
  %62 = vst.msk [vmem:[%s2 + $0x20] sm:$0xff] %vm59, %v54
  %63 = vst.msk [vmem:[%s2 + $0x30] sm:$0xff] %vm59, %v57
  %68 = vrot.lane.b32.xlu0 %v48, 32
  %v69 = vpop.permute.xlu0 %68
  %70 = vrot.lane.b32.xlu0 %v51, 32
  %v71 = vpop.permute.xlu0 %70
  %72 = vrot.lane.b32.xlu0 %v54, 32
  %v73 = vpop.permute.xlu0 %72
  %74 = vrot.lane.b32.xlu0 %v57, 32
  %v75 = vpop.permute.xlu0 %74
  %vm80 = vcmask 523520
  %81 = vst.msk [vmem:[%s2] sm:$0xff] %vm80, %v69
  %82 = vst.msk [vmem:[%s2 + $0x10] sm:$0xff] %vm80, %v71
  %83 = vst.msk [vmem:[%s2 + $0x20] sm:$0xff] %vm80, %v73
  %84 = vst.msk [vmem:[%s2 + $0x30] sm:$0xff] %vm80, %v75
  %v85 = vld [vmem:[%s0] sm:$0xff]
  %v86 = vld [vmem:[%s0 + $0x8] sm:$0xff]
  %v87 = vld [vmem:[%s0 + $0x10] sm:$0xff]
  %v88 = vld [vmem:[%s0 + $0x18] sm:$0xff]
  %93 = vrot.lane.b32.xlu0 %v85, 112
  %v94 = vpop.permute.xlu0 %93
  %95 = vrot.lane.b32.xlu0 %v86, 112
  %v96 = vpop.permute.xlu0 %95
  %97 = vrot.lane.b32.xlu0 %v87, 112
  %v98 = vpop.permute.xlu0 %97
  %99 = vrot.lane.b32.xlu0 %v88, 112
  %v100 = vpop.permute.xlu0 %99
  %v101 = vsel %vm17, %v94, 0
  %v103 = vsel %vm17, %v96, 0
  %v105 = vsel %vm17, %v98, 0
  %v107 = vsel %vm17, %v100, 0
  %109 = vmatpush.msra.mxu0 0.0
  %110 = vmatpush.msra.mxu0 0.0
  %111 = vmatpush.msra.mxu0 0.0
  %112 = vmatpush.msra.mxu0 0.0
  %113 = vmatpush.msra.mxu0 0.0
  %114 = vmatpush.msra.mxu0 0.0
  %115 = vmatpush.msra.mxu0 0.0
  %116 = vmatpush.msra.mxu0 0.0
  %117 = vmatpush.msra.mxu0 0.0
  %118 = vmatpush.msra.mxu0 0.0
  %119 = vmatpush.msra.mxu0 0.0
  %120 = vmatpush.msra.mxu0 0.0
  %121 = vmatpush.msra.mxu0 0.0
  %122 = vmatpush.msra.mxu0 0.0
  %123 = vmatpush.msra.mxu0 %v12
  %124 = vmatpush.msra.mxu0 %v11
  %125 = vmatmul.f32.gmra.mxu0 %v101
  %v126 = vpop.f32.mrf.mxu0
  %v127 = vadd.f32 0.0, %v126
  %128 = vmatmul.f32.gmra.mxu0 %v103
  %v129 = vpop.f32.mrf.mxu0
  %v130 = vadd.f32 0.0, %v129
  %131 = vmatmul.f32.gmra.mxu0 %v105
  %v132 = vpop.f32.mrf.mxu0
  %v133 = vadd.f32 0.0, %v132
  %134 = vmatmul.f32.gmra.mxu0 %v107
  %v135 = vpop.f32.mrf.mxu0
  %v136 = vadd.f32 0.0, %v135
  %137 = vdwg.mxu0
  %142 = vrot.lane.b32.xlu0 %v127, 64
  %v143 = vpop.permute.xlu0 %142
  %144 = vrot.lane.b32.xlu0 %v130, 64
  %v145 = vpop.permute.xlu0 %144
  %146 = vrot.lane.b32.xlu0 %v133, 64
  %v147 = vpop.permute.xlu0 %146
  %148 = vrot.lane.b32.xlu0 %v136, 64
  %v149 = vpop.permute.xlu0 %148
  %vm154 = vcmask 785920
  %155 = vst.msk [vmem:[%s2] sm:$0xff] %vm154, %v143
  %156 = vst.msk [vmem:[%s2 + $0x10] sm:$0xff] %vm154, %v145
  %157 = vst.msk [vmem:[%s2 + $0x20] sm:$0xff] %vm154, %v147
  %158 = vst.msk [vmem:[%s2 + $0x30] sm:$0xff] %vm154, %v149
  %159 = vrot.lane.b32.xlu0 %v127, 96
  %v160 = vpop.permute.xlu0 %159
  %161 = vrot.lane.b32.xlu0 %v130, 96
  %v162 = vpop.permute.xlu0 %161
  %163 = vrot.lane.b32.xlu0 %v133, 96
  %v164 = vpop.permute.xlu0 %163
  %165 = vrot.lane.b32.xlu0 %v136, 96
  %v166 = vpop.permute.xlu0 %165
  %vm171 = vcmask 1048320
  %172 = vst.msk [vmem:[%s2] sm:$0xff] %vm171, %v160
  %173 = vst.msk [vmem:[%s2 + $0x10] sm:$0xff] %vm171, %v162
  %174 = vst.msk [vmem:[%s2 + $0x20] sm:$0xff] %vm171, %v164
  %175 = vst.msk [vmem:[%s2 + $0x30] sm:$0xff] %vm171, %v166
  %v176 = vld [vmem:[%s0] sm:$0xff]
  %v177 = vld [vmem:[%s0 + $0x8] sm:$0xff]
  %v178 = vld [vmem:[%s0 + $0x10] sm:$0xff]
  %v179 = vld [vmem:[%s0 + $0x18] sm:$0xff]
  %184 = vrot.lane.b32.xlu0 %v176, 96
  %v185 = vpop.permute.xlu0 %184
  %186 = vrot.lane.b32.xlu0 %v177, 96
  %v187 = vpop.permute.xlu0 %186
  %188 = vrot.lane.b32.xlu0 %v178, 96
  %v189 = vpop.permute.xlu0 %188
  %190 = vrot.lane.b32.xlu0 %v179, 96
  %v191 = vpop.permute.xlu0 %190
  %v192 = vsel %vm17, %v185, 0
  %v194 = vsel %vm17, %v187, 0
  %v196 = vsel %vm17, %v189, 0
  %v198 = vsel %vm17, %v191, 0
  %200 = vmatpush.msra.mxu0 0.0
  %201 = vmatpush.msra.mxu0 0.0
  %202 = vmatpush.msra.mxu0 0.0
  %203 = vmatpush.msra.mxu0 0.0
  %204 = vmatpush.msra.mxu0 0.0
  %205 = vmatpush.msra.mxu0 0.0
  %206 = vmatpush.msra.mxu0 0.0
  %207 = vmatpush.msra.mxu0 0.0
  %208 = vmatpush.msra.mxu0 0.0
  %209 = vmatpush.msra.mxu0 0.0
  %210 = vmatpush.msra.mxu0 0.0
  %211 = vmatpush.msra.mxu0 0.0
  %212 = vmatpush.msra.mxu0 0.0
  %213 = vmatpush.msra.mxu0 0.0
  %214 = vmatpush.msra.mxu0 %v12
  %215 = vmatpush.msra.mxu0 %v11
  %216 = vmatmul.f32.gmra.mxu0 %v192
  %v217 = vpop.f32.mrf.mxu0
  %v218 = vadd.f32 0.0, %v217
  %219 = vmatmul.f32.gmra.mxu0 %v194
  %v220 = vpop.f32.mrf.mxu0
  %v221 = vadd.f32 0.0, %v220
  %222 = vmatmul.f32.gmra.mxu0 %v196
  %v223 = vpop.f32.mrf.mxu0
  %v224 = vadd.f32 0.0, %v223
  %225 = vmatmul.f32.gmra.mxu0 %v198
  %v226 = vpop.f32.mrf.mxu0
  %v227 = vadd.f32 0.0, %v226
  %228 = vdwg.mxu0
  %229 = vst.msk [vmem:[%s2 + $0x8] sm:$0xff] %vm59, %v218
  %230 = vst.msk [vmem:[%s2 + $0x18] sm:$0xff] %vm59, %v221
  %231 = vst.msk [vmem:[%s2 + $0x28] sm:$0xff] %vm59, %v224
  %232 = vst.msk [vmem:[%s2 + $0x38] sm:$0xff] %vm59, %v227
  %237 = vrot.lane.b32.xlu0 %v218, 32
  %v238 = vpop.permute.xlu0 %237
  %239 = vrot.lane.b32.xlu0 %v221, 32
  %v240 = vpop.permute.xlu0 %239
  %241 = vrot.lane.b32.xlu0 %v224, 32
  %v242 = vpop.permute.xlu0 %241
  %243 = vrot.lane.b32.xlu0 %v227, 32
  %v244 = vpop.permute.xlu0 %243
  %249 = vst.msk [vmem:[%s2 + $0x8] sm:$0xff] %vm80, %v238
  %250 = vst.msk [vmem:[%s2 + $0x18] sm:$0xff] %vm80, %v240
  %251 = vst.msk [vmem:[%s2 + $0x28] sm:$0xff] %vm80, %v242
  %252 = vst.msk [vmem:[%s2 + $0x38] sm:$0xff] %vm80, %v244
  %v253 = vld [vmem:[%s0] sm:$0xff]
  %v254 = vld [vmem:[%s0 + $0x8] sm:$0xff]
  %v255 = vld [vmem:[%s0 + $0x10] sm:$0xff]
  %v256 = vld [vmem:[%s0 + $0x18] sm:$0xff]
  %261 = vrot.lane.b32.xlu0 %v253, 80
  %v262 = vpop.permute.xlu0 %261
  %263 = vrot.lane.b32.xlu0 %v254, 80
  %v264 = vpop.permute.xlu0 %263
  %265 = vrot.lane.b32.xlu0 %v255, 80
  %v266 = vpop.permute.xlu0 %265
  %267 = vrot.lane.b32.xlu0 %v256, 80
  %v268 = vpop.permute.xlu0 %267
  %v269 = vsel %vm17, %v262, 0
  %v271 = vsel %vm17, %v264, 0
  %v273 = vsel %vm17, %v266, 0
  %v275 = vsel %vm17, %v268, 0
  %277 = vmatpush.msra.mxu0 0.0
  %278 = vmatpush.msra.mxu0 0.0
  %279 = vmatpush.msra.mxu0 0.0
  %280 = vmatpush.msra.mxu0 0.0
  %281 = vmatpush.msra.mxu0 0.0
  %282 = vmatpush.msra.mxu0 0.0
  %283 = vmatpush.msra.mxu0 0.0
  %284 = vmatpush.msra.mxu0 0.0
  %285 = vmatpush.msra.mxu0 0.0
  %286 = vmatpush.msra.mxu0 0.0
  %287 = vmatpush.msra.mxu0 0.0
  %288 = vmatpush.msra.mxu0 0.0
  %289 = vmatpush.msra.mxu0 0.0
  %290 = vmatpush.msra.mxu0 0.0
  %291 = vmatpush.msra.mxu0 %v12
  %292 = vmatpush.msra.mxu0 %v11
  %293 = vmatmul.f32.gmra.mxu0 %v269
  %v294 = vpop.f32.mrf.mxu0
  %v295 = vadd.f32 0.0, %v294
  %296 = vmatmul.f32.gmra.mxu0 %v271
  %v297 = vpop.f32.mrf.mxu0
  %v298 = vadd.f32 0.0, %v297
  %299 = vmatmul.f32.gmra.mxu0 %v273
  %v300 = vpop.f32.mrf.mxu0
  %v301 = vadd.f32 0.0, %v300
  %302 = vmatmul.f32.gmra.mxu0 %v275
  %v303 = vpop.f32.mrf.mxu0
  %v304 = vadd.f32 0.0, %v303
  %305 = vdwg.mxu0
  %310 = vrot.lane.b32.xlu0 %v295, 64
  %v311 = vpop.permute.xlu0 %310
  %312 = vrot.lane.b32.xlu0 %v298, 64
  %v313 = vpop.permute.xlu0 %312
  %314 = vrot.lane.b32.xlu0 %v301, 64
  %v315 = vpop.permute.xlu0 %314
  %316 = vrot.lane.b32.xlu0 %v304, 64
  %v317 = vpop.permute.xlu0 %316
  %322 = vst.msk [vmem:[%s2 + $0x8] sm:$0xff] %vm154, %v311
  %323 = vst.msk [vmem:[%s2 + $0x18] sm:$0xff] %vm154, %v313
  %324 = vst.msk [vmem:[%s2 + $0x28] sm:$0xff] %vm154, %v315
  %325 = vst.msk [vmem:[%s2 + $0x38] sm:$0xff] %vm154, %v317
  %326 = vrot.lane.b32.xlu0 %v295, 96
  %v327 = vpop.permute.xlu0 %326
  %328 = vrot.lane.b32.xlu0 %v298, 96
  %v329 = vpop.permute.xlu0 %328
  %330 = vrot.lane.b32.xlu0 %v301, 96
  %v331 = vpop.permute.xlu0 %330
  %332 = vrot.lane.b32.xlu0 %v304, 96
  %v333 = vpop.permute.xlu0 %332
  %338 = vst.msk [vmem:[%s2 + $0x8] sm:$0xff] %vm171, %v327
  %339 = vst.msk [vmem:[%s2 + $0x18] sm:$0xff] %vm171, %v329
  %340 = vst.msk [vmem:[%s2 + $0x28] sm:$0xff] %vm171, %v331
  %341 = vst.msk [vmem:[%s2 + $0x38] sm:$0xff] %vm171, %v333
  // Predicated region
  $region10: #{interpolate_nearest.1} parent=0 // pred_check
    _
  $region11: #{interpolate_nearest.1} parent=0 // pred_check_branch
    %343 = sbr.rel (0) target = $region13
  $region12: #{interpolate_nearest.1} parent=0 // pred_region
    _
  $region13: #{interpolate_nearest.1} parent=0 // pred_fallthru
    _
  // Predicated region
  $region14: #{interpolate_nearest.1} parent=0 // pred_check
    _
  $region15: #{interpolate_nearest.1} parent=0 // pred_check_branch
    %345 = sbr.rel (0) target = $region17
  $region16: #{interpolate_nearest.1} parent=0 // pred_region
    _
  $region17: #{interpolate_nearest.1} parent=0 // pred_fallthru
    _

</llo_original>
